<compile_context>
chip_gen: v7x
topology: tpu7x:2x2x1
jax: 0.10.0
libtpu: 0.0.40
codegen_flags: <defaults>
</compile_context>

<pallas_src>
import jax
import jax.numpy as jnp
from jax.experimental import pallas as pl
from jax.experimental.pallas import tpu as pltpu


def _round_up(x, m):
    return (x + m - 1) // m * m


def _vmem_capacity_bytes():
    try:
        return pltpu.get_tpu_info().vmem_capacity_bytes
    except Exception:
        return 64 << 20  # conservative (v7x per-TensorCore VMEM)


def _dann_feature_kernel(x_ref, w1_ref, b1_ref, w2_ref, b2_ref, o_ref):
    # Streamed activations: cast to bf16 on the VPU (no-op if already bf16).
    x = x_ref[...].astype(jnp.bfloat16)
    # Linear 1: bf16 MXU matmul, f32 accumulation; bias + ReLU in f32 (VPU).
    h = jnp.dot(x, w1_ref[...], preferred_element_type=jnp.float32)
    h = jnp.maximum(h + b1_ref[...], 0.0)
    # Linear 2: bf16 operands, f32 accumulation, f32 bias epilogue.
    out = jnp.dot(h.astype(jnp.bfloat16), w2_ref[...],
                  preferred_element_type=jnp.float32)
    o_ref[...] = (out + b2_ref[...]).astype(o_ref.dtype)


def dann_forward(x, w1, b1, w2, b2, *, block_b=2048, out_dtype=None,
                 force_pallas=False):
    """Feature extractor forward: ReLU(x @ w1 + b1) @ w2 + b2."""
    B, K = x.shape
    H1 = w1.shape[1]          # 256
    H2 = w2.shape[1]          # 128
    out_dtype = x.dtype if out_dtype is None else out_dtype

    b1_r = b1.reshape(1, H1).astype(jnp.float32)
    b2_r = b2.reshape(1, H2).astype(jnp.float32)

    # Tiny problems: kernel launch + per-step overhead dominates -> plain XLA.
    if not force_pallas and B * K < (1 << 14):
        h = jnp.maximum(jnp.dot(x, w1) + b1_r, 0.0)
        return (jnp.dot(h, w2) + b2_r).astype(out_dtype)

    # Small resident weights are cast to bf16 once (x, the batch-sized stream,
    # is left untouched in HBM and cast in-kernel).
    w1_b = w1.astype(jnp.bfloat16)
    w2_b = w2.astype(jnp.bfloat16)

    x_bytes = x.dtype.itemsize
    o_bytes = jnp.dtype(out_dtype).itemsize

    # ---- Batch-tile selection (VMEM budget + >=2 grid steps) ---------------
    # Resident bytes: bf16 weights + f32 biases (single-buffered).
    resident = 2 * (K * H1 + H1 * H2) + 4 * (H1 + H2)
    # Per-row bytes of a batch tile: x double buffer + in-kernel bf16 copy,
    # h (f32 + bf16), out double buffer + f32 pre-cast temp.
    row_bytes = (K * (2 * x_bytes + 2)
                 + H1 * (4 + 2)
                 + H2 * (2 * o_bytes + 4))
    budget = min(_vmem_capacity_bytes() // 3, 40 << 20) - resident
    tb_vmem = max(16, (budget // row_bytes) // 16 * 16)
    # >= 2 grid steps so dual-TensorCore parts (v7x) shard the batch axis;
    # rounded to 16 rows (bf16 sublane packing / f32 output alignment).
    TB = max(16, min(block_b, tb_vmem, _round_up(pl.cdiv(B, 2), 16)))
    grid = (pl.cdiv(B, TB),)

    footprint = TB * row_bytes + resident
    vmem_limit = min(max(3 * footprint // 2 + (1 << 20), 32 << 20), 100 << 20)

    cost = pl.CostEstimate(
        flops=2 * B * (K * H1 + H1 * H2),
        transcendentals=0,
        bytes_accessed=(B * K * x_bytes            # x read (native dtype)
                        + K * H1 * 2 + H1 * H2 * 2  # bf16 weights (read once)
                        + (H1 + H2) * 4             # biases
                        + B * H2 * o_bytes),        # output write
    )

    def run(single_buffer_weights):
        # Constant-index operands are fetched once and stay VMEM-resident;
        # single-buffer them to reclaim VMEM when supported.
        res_kw = ({"pipeline_mode": pl.Buffered(1)}
                  if single_buffer_weights else {})
        return pl.pallas_call(
            _dann_feature_kernel,
            out_shape=jax.ShapeDtypeStruct((B, H2), out_dtype),
            grid=grid,
            in_specs=[
                pl.BlockSpec((TB, K), lambda i: (i, 0)),             # x stream
                pl.BlockSpec((K, H1), lambda i: (0, 0), **res_kw),   # w1
                pl.BlockSpec((1, H1), lambda i: (0, 0), **res_kw),   # b1
                pl.BlockSpec((H1, H2), lambda i: (0, 0), **res_kw),  # w2
                pl.BlockSpec((1, H2), lambda i: (0, 0), **res_kw),   # b2
            ],
            out_specs=pl.BlockSpec((TB, H2), lambda i: (i, 0)),
            compiler_params=pltpu.CompilerParams(
                dimension_semantics=("parallel",),
                vmem_limit_bytes=vmem_limit),
            cost_estimate=cost,
        )(x, w1_b, b1_r, w2_b, b2_r)

    try:
        return run(True)
    except Exception:
        # Fallback if this JAX build rejects pl.Buffered(1) on a pallas_call
        # BlockSpec; double-buffered weights still fit comfortably.
        return run(False)


def init_params(key, feature_dim):
    """Deterministic init mimicking nn.Linear's U(-1/sqrt(fan_in), 1/sqrt(fan_in))."""
    def linear(key, fan_in, fan_out):
        kw, kb = jax.random.split(key)
        bound = 1.0 / (fan_in ** 0.5)
        w = jax.random.uniform(kw, (fan_in, fan_out), jnp.float32, -bound, bound)
        b = jax.random.uniform(kb, (1, fan_out), jnp.float32, -bound, bound)
        return w, b

    k1, k2, k3, k4 = jax.random.split(key, 4)
    # feature_extractor
    w1, b1 = linear(k1, feature_dim, 256)
    w2, b2 = linear(k2, 256, 128)
    # domain_classifier (defined in __init__ but never used in forward)
    w3, b3 = linear(k3, 128, 64)
    w4, b4 = linear(k4, 64, 2)
    return (w1, b1, w2, b2), (w3, b3, w4, b4)


if __name__ == "__main__":
    key = jax.random.PRNGKey(0)
    kx, kp = jax.random.split(key)

    batch, feature_dim = 8, 32
    x = jax.random.normal(kx, (batch, feature_dim), jnp.float32)
    (w1, b1, w2, b2), _domain_cls = init_params(kp, feature_dim)

    # Pallas path (forced: at this demo size the auto path would pick XLA).
    features = jax.block_until_ready(
        dann_forward(x, w1, b1, w2, b2, force_pallas=True))
    ref = jnp.maximum(x @ w1 + b1, 0.0) @ w2 + b2
    assert features.shape == (batch, 128)
    assert jnp.allclose(features, ref, atol=2e-2, rtol=2e-2), float(
        jnp.max(jnp.abs(features - ref)))

    # Ragged batch: B=40, TB=32 -> 2 grid steps, last block masked on store.
    x2 = jax.random.normal(jax.random.PRNGKey(1), (40, feature_dim), jnp.float32)
    f2 = jax.block_until_ready(
        dann_forward(x2, w1, b1, w2, b2, force_pallas=True))
    ref2 = jnp.maximum(x2 @ w1 + b1, 0.0) @ w2 + b2
    assert f2.shape == (40, 128)
    assert jnp.allclose(f2, ref2, atol=2e-2, rtol=2e-2)

    # Tiny-input fast path (plain XLA, exact f32).
    f3 = jax.block_until_ready(dann_forward(x, w1, b1, w2, b2))
    assert jnp.allclose(f3, ref, atol=1e-5, rtol=1e-5)

    print("KERNEL_OK")
</pallas_src>

<mosaic_0001>
module attributes {stable_mosaic.version = 11 : i64} {
  func.func @_dann_feature_kernel(%arg0: i32, %arg1: memref<16x32xf32, #tpu.memory_space<vmem>>, %arg2: memref<32x256xbf16, #tpu.memory_space<vmem>>, %arg3: memref<1x256xf32, #tpu.memory_space<vmem>>, %arg4: memref<256x128xbf16, #tpu.memory_space<vmem>>, %arg5: memref<1x128xf32, #tpu.memory_space<vmem>>, %arg6: memref<16x128xf32, #tpu.memory_space<vmem>>) attributes {dimension_semantics = [#tpu.dimension_semantics<parallel>], iteration_bounds = array<i64: 1>, scalar_prefetch = 0 : i64, scratch_operands = 0 : i64, tpu.core_type = #tpu.core_type<tc>, window_params = [{transform_indices = @transform_0, window_bounds = array<i64: 16, 32>}, {pipeline_mode = #tpu.pipeline_mode<synchronous>, transform_indices = @transform_1, window_bounds = array<i64: 32, 256>}, {pipeline_mode = #tpu.pipeline_mode<synchronous>, transform_indices = @transform_2, window_bounds = array<i64: 1, 256>}, {pipeline_mode = #tpu.pipeline_mode<synchronous>, transform_indices = @transform_3, window_bounds = array<i64: 256, 128>}, {pipeline_mode = #tpu.pipeline_mode<synchronous>, transform_indices = @transform_4, window_bounds = array<i64: 1, 128>}, {transform_indices = @transform_5, window_bounds = array<i64: 16, 128>}]} {
    %c0 = arith.constant 0 : index
    %c0_0 = arith.constant 0 : index
    %0 = vector.load %arg1[%c0, %c0_0] : memref<16x32xf32, #tpu.memory_space<vmem>>, vector<16x32xf32>
    %1 = arith.truncf %0 : vector<16x32xf32> to vector<16x32xbf16>
    %c0_1 = arith.constant 0 : index
    %c0_2 = arith.constant 0 : index
    %2 = vector.load %arg2[%c0_1, %c0_2] : memref<32x256xbf16, #tpu.memory_space<vmem>>, vector<32x256xbf16>
    %cst = arith.constant dense<0.000000e+00> : vector<16x256xf32>
    %3 = tpu.matmul %1, %2, %cst {dimension_numbers = #tpu.dot_dimension_numbers<[1], [0], [0], [1], [0, 0, 1, 1], [], []>} : vector<16x32xbf16>, vector<32x256xbf16>, vector<16x256xf32> -> vector<16x256xf32>
    %c0_3 = arith.constant 0 : index
    %c0_4 = arith.constant 0 : index
    %4 = vector.load %arg3[%c0_3, %c0_4] : memref<1x256xf32, #tpu.memory_space<vmem>>, vector<1x256xf32>
    %5 = vector.broadcast %4 : vector<1x256xf32> to vector<16x256xf32>
    %6 = arith.addf %3, %5 : vector<16x256xf32>
    %cst_5 = arith.constant 0.000000e+00 : f32
    %7 = vector.broadcast %cst_5 : f32 to vector<16x256xf32>
    %8 = arith.maximumf %6, %7 : vector<16x256xf32>
    %9 = arith.truncf %8 : vector<16x256xf32> to vector<16x256xbf16>
    %c0_6 = arith.constant 0 : index
    %c0_7 = arith.constant 0 : index
    %10 = vector.load %arg4[%c0_6, %c0_7] : memref<256x128xbf16, #tpu.memory_space<vmem>>, vector<256x128xbf16>
    %cst_8 = arith.constant dense<0.000000e+00> : vector<16x128xf32>
    %11 = tpu.matmul %9, %10, %cst_8 {dimension_numbers = #tpu.dot_dimension_numbers<[1], [0], [0], [1], [0, 0, 1, 1], [], []>} : vector<16x256xbf16>, vector<256x128xbf16>, vector<16x128xf32> -> vector<16x128xf32>
    %c0_9 = arith.constant 0 : index
    %c0_10 = arith.constant 0 : index
    %12 = vector.load %arg5[%c0_9, %c0_10] : memref<1x128xf32, #tpu.memory_space<vmem>>, vector<1x128xf32>
    %13 = vector.broadcast %12 : vector<1x128xf32> to vector<16x128xf32>
    %14 = arith.addf %11, %13 : vector<16x128xf32>
    %c0_11 = arith.constant 0 : index
    %c0_12 = arith.constant 0 : index
    %15 = vector.load %arg6[%c0_11, %c0_12] : memref<16x128xf32, #tpu.memory_space<vmem>>, vector<16x128xf32>
    tpu.vector_store %arg6[%c0_11, %c0_12], %14 {strides = array<i32>} : memref<16x128xf32, #tpu.memory_space<vmem>>, vector<16x128xf32>,
    return
  }
  func.func @transform_0(%arg0: i32) -> (i32, i32) {
    %c0_i32 = arith.constant 0 : i32
    %c0_i32_0 = arith.constant 0 : i32
    return %arg0, %c0_i32 : i32, i32
  }
  func.func @transform_1(%arg0: i32) -> (i32, i32) {
    %c0_i32 = arith.constant 0 : i32
    %c0_i32_0 = arith.constant 0 : i32
    %c0_i32_1 = arith.constant 0 : i32
    return %c0_i32, %c0_i32_0 : i32, i32
  }
  func.func @transform_2(%arg0: i32) -> (i32, i32) {
    %c0_i32 = arith.constant 0 : i32
    %c0_i32_0 = arith.constant 0 : i32
    %c0_i32_1 = arith.constant 0 : i32
    return %c0_i32, %c0_i32_0 : i32, i32
  }
  func.func @transform_3(%arg0: i32) -> (i32, i32) {
    %c0_i32 = arith.constant 0 : i32
    %c0_i32_0 = arith.constant 0 : i32
    %c0_i32_1 = arith.constant 0 : i32
    return %c0_i32, %c0_i32_0 : i32, i32
  }
  func.func @transform_4(%arg0: i32) -> (i32, i32) {
    %c0_i32 = arith.constant 0 : i32
    %c0_i32_0 = arith.constant 0 : i32
    %c0_i32_1 = arith.constant 0 : i32
    return %c0_i32, %c0_i32_0 : i32, i32
  }
  func.func @transform_5(%arg0: i32) -> (i32, i32) {
    %c0_i32 = arith.constant 0 : i32
    %c0_i32_0 = arith.constant 0 : i32
    return %arg0, %c0_i32 : i32, i32
  }
}

module attributes {stable_mosaic.version = 11 : i64} {
  func.func @_dann_feature_kernel(%arg0: i32, %arg1: memref<16x32xf32, #tpu.memory_space<vmem>>, %arg2: memref<32x256xbf16, #tpu.memory_space<vmem>>, %arg3: memref<1x256xf32, #tpu.memory_space<vmem>>, %arg4: memref<256x128xbf16, #tpu.memory_space<vmem>>, %arg5: memref<1x128xf32, #tpu.memory_space<vmem>>, %arg6: memref<16x128xf32, #tpu.memory_space<vmem>>) attributes {dimension_semantics = [#tpu.dimension_semantics<parallel>], iteration_bounds = array<i64: 1>, scalar_prefetch = 0 : i64, scratch_operands = 0 : i64, tpu.core_type = #tpu.core_type<tc>, window_params = [{transform_indices = @transform_0, window_bounds = array<i64: 16, 32>}, {pipeline_mode = #tpu.pipeline_mode<synchronous>, transform_indices = @transform_1, window_bounds = array<i64: 32, 256>}, {pipeline_mode = #tpu.pipeline_mode<synchronous>, transform_indices = @transform_2, window_bounds = array<i64: 1, 256>}, {pipeline_mode = #tpu.pipeline_mode<synchronous>, transform_indices = @transform_3, window_bounds = array<i64: 256, 128>}, {pipeline_mode = #tpu.pipeline_mode<synchronous>, transform_indices = @transform_4, window_bounds = array<i64: 1, 128>}, {transform_indices = @transform_5, window_bounds = array<i64: 16, 128>}]} {
    %c0 = arith.constant 0 : index
    %c0_0 = arith.constant 0 : index
    %0 = vector.load %arg1[%c0, %c0_0] : memref<16x32xf32, #tpu.memory_space<vmem>>, vector<16x32xf32>
    %1 = arith.truncf %0 : vector<16x32xf32> to vector<16x32xbf16>
    %c0_1 = arith.constant 0 : index
    %c0_2 = arith.constant 0 : index
    %2 = vector.load %arg2[%c0_1, %c0_2] : memref<32x256xbf16, #tpu.memory_space<vmem>>, vector<32x256xbf16>
    %cst = arith.constant dense<0.000000e+00> : vector<16x256xf32>
    %3 = tpu.matmul %1, %2, %cst {dimension_numbers = #tpu.dot_dimension_numbers<[1], [0], [0], [1], [0, 0, 1, 1], [], []>} : vector<16x32xbf16>, vector<32x256xbf16>, vector<16x256xf32> -> vector<16x256xf32>
    %c0_3 = arith.constant 0 : index
    %c0_4 = arith.constant 0 : index
    %4 = vector.load %arg3[%c0_3, %c0_4] : memref<1x256xf32, #tpu.memory_space<vmem>>, vector<1x256xf32>
    %5 = vector.broadcast %4 : vector<1x256xf32> to vector<16x256xf32>
    %6 = arith.addf %3, %5 : vector<16x256xf32>
    %cst_5 = arith.constant 0.000000e+00 : f32
    %7 = vector.broadcast %cst_5 : f32 to vector<16x256xf32>
    %8 = arith.maximumf %6, %7 : vector<16x256xf32>
    %9 = arith.truncf %8 : vector<16x256xf32> to vector<16x256xbf16>
    %c0_6 = arith.constant 0 : index
    %c0_7 = arith.constant 0 : index
    %10 = vector.load %arg4[%c0_6, %c0_7] : memref<256x128xbf16, #tpu.memory_space<vmem>>, vector<256x128xbf16>
    %cst_8 = arith.constant dense<0.000000e+00> : vector<16x128xf32>
    %11 = tpu.matmul %9, %10, %cst_8 {dimension_numbers = #tpu.dot_dimension_numbers<[1], [0], [0], [1], [0, 0, 1, 1], [], []>} : vector<16x256xbf16>, vector<256x128xbf16>, vector<16x128xf32> -> vector<16x128xf32>
    %c0_9 = arith.constant 0 : index
    %c0_10 = arith.constant 0 : index
    %12 = vector.load %arg5[%c0_9, %c0_10] : memref<1x128xf32, #tpu.memory_space<vmem>>, vector<1x128xf32>
    %13 = vector.broadcast %12 : vector<1x128xf32> to vector<16x128xf32>
    %14 = arith.addf %11, %13 : vector<16x128xf32>
    %c0_11 = arith.constant 0 : index
    %c0_12 = arith.constant 0 : index
    %15 = vector.load %arg6[%c0_11, %c0_12] : memref<16x128xf32, #tpu.memory_space<vmem>>, vector<16x128xf32>
    tpu.vector_store %arg6[%c0_11, %c0_12], %14 {strides = array<i32>} : memref<16x128xf32, #tpu.memory_space<vmem>>, vector<16x128xf32>,
    return
  }
  func.func @transform_0(%arg0: i32) -> (i32, i32) {
    %c0_i32 = arith.constant 0 : i32
    %c0_i32_0 = arith.constant 0 : i32
    return %arg0, %c0_i32 : i32, i32
  }
  func.func @transform_1(%arg0: i32) -> (i32, i32) {
    %c0_i32 = arith.constant 0 : i32
    %c0_i32_0 = arith.constant 0 : i32
    %c0_i32_1 = arith.constant 0 : i32
    return %c0_i32, %c0_i32_0 : i32, i32
  }
  func.func @transform_2(%arg0: i32) -> (i32, i32) {
    %c0_i32 = arith.constant 0 : i32
    %c0_i32_0 = arith.constant 0 : i32
    %c0_i32_1 = arith.constant 0 : i32
    return %c0_i32, %c0_i32_0 : i32, i32
  }
  func.func @transform_3(%arg0: i32) -> (i32, i32) {
    %c0_i32 = arith.constant 0 : i32
    %c0_i32_0 = arith.constant 0 : i32
    %c0_i32_1 = arith.constant 0 : i32
    return %c0_i32, %c0_i32_0 : i32, i32
  }
  func.func @transform_4(%arg0: i32) -> (i32, i32) {
    %c0_i32 = arith.constant 0 : i32
    %c0_i32_0 = arith.constant 0 : i32
    %c0_i32_1 = arith.constant 0 : i32
    return %c0_i32, %c0_i32_0 : i32, i32
  }
  func.func @transform_5(%arg0: i32) -> (i32, i32) {
    %c0_i32 = arith.constant 0 : i32
    %c0_i32_0 = arith.constant 0 : i32
    return %arg0, %c0_i32 : i32, i32
  }
}

</mosaic_0001>

<llo_original>
// kernel: tpu_custom_call.1
$region0: #{tpu_custom_call.1}
  #allocation0 [shape = 'u32[]', space=smem, size = 0x4, offset = 0x4, fixed_abs, tag = 'smem constant byte address 0x4 - core index']
  #allocation1 [shape = 'u32[144,128]{1,0:T(1,128)}', space=vmem, size = 0x12000, scoped, tag = 'internal scratch']
  %s0 = inlined_call_operand.hbm [shape: f32[8,32], index: 0, kind: input, shape index: {}]
  %s1 = inlined_call_operand.hbm [shape: bf16[32,256], index: 1, kind: input, shape index: {}]
  %s2 = inlined_call_operand.vmem [shape: f32[1,256], index: 2, kind: input, shape index: {}]
  %s3 = inlined_call_operand.hbm [shape: bf16[256,128], index: 3, kind: input, shape index: {}]
  %s4 = inlined_call_operand.vmem [shape: f32[1,128], index: 4, kind: input, shape index: {}]
  %s5 = inlined_call_operand.hbm [shape: f32[8,128], index: 5, kind: output, shape index: {}]
  %s6 = sld [smem:[#allocation0]]
  $region42: #{tpu_custom_call.1} parent=0
    _
  %s8 = ssub.s32 1, %s6
  %s9 = scalar_select 0, %s8, %s6
  $region1: #{tpu_custom_call.1} parent=0
    #allocation2 [shape = 'u8[8192]{0}', space=vmem, size = 0x2000, scoped, tag = 'input window, operand 0, single buffered']
    #allocation3 [shape = 's32[1]{0}', space=sflag, size = 0x4, scoped, tag = 'scoped memory for tpu_custom_call.1']
    #allocation4 [shape = 's32[1]{0}', space=sflag, size = 0x4, scoped, tag = 'scoped memory for tpu_custom_call.1']
    #allocation5 [shape = 'u8[16384]{0}', space=vmem, size = 0x4000, scoped, tag = 'input window, operand 1, single buffered']
    #allocation6 [shape = 's32[1]{0}', space=sflag, size = 0x4, scoped, tag = 'scoped memory for tpu_custom_call.1']
    #allocation7 [shape = 'u8[65536]{0}', space=vmem, size = 0x10000, scoped, tag = 'input window, operand 3, single buffered']
    #allocation8 [shape = 'u8[8192]{0}', space=vmem, size = 0x2000, scoped, tag = 'output window, operand 0, single buffered']
    %10 = vsyncpa [#allocation3], 0
    %11 = vsyncpa [#allocation6], 0
    %12 = vsyncpa [#allocation4], 0
    // Predicated region
    $region2: #{tpu_custom_call.1} parent=1 // pred_check
      _
    $region3: #{tpu_custom_call.1} parent=1 // pred_check_branch
      %14 = sbr.rel (0) target = $region5
    $region4: #{tpu_custom_call.1} parent=1 // pred_region
      %s16 = ssub.s32 256, 128
      %17 = vsyncadd [#allocation3], %s16
      %s18 = sshll.u32 [#allocation2], 4
      %s19 = int_to_ptr.vmem [resolvable:$true] %s18
      %24 = dma.hbm_to_vmem [thread:$0]  %s0, 128, %s19, [#allocation3], 128, 128, 8
    $region5: #{tpu_custom_call.1} parent=1 // pred_fallthru
      _
    // Predicated region
    $region6: #{tpu_custom_call.1} parent=1 // pred_check
      _
    $region7: #{tpu_custom_call.1} parent=1 // pred_check_branch
      %26 = sbr.rel (0) target = $region9
    $region8: #{tpu_custom_call.1} parent=1 // pred_region
      %s28 = ssub.s32 512, 512
      %29 = vsyncadd [#allocation6], %s28
      %s30 = sshll.u32 [#allocation5], 4
      %s31 = int_to_ptr.vmem [resolvable:$true] %s30
      %36 = dma.hbm_to_vmem [thread:$0]  %s1, 512, %s31, [#allocation6], 128, 128, 8
    $region9: #{tpu_custom_call.1} parent=1 // pred_fallthru
      _
    // Predicated region
    $region10: #{tpu_custom_call.1} parent=1 // pred_check
      _
    $region11: #{tpu_custom_call.1} parent=1 // pred_check_branch
      %38 = sbr.rel (0) target = $region13
    $region12: #{tpu_custom_call.1} parent=1 // pred_region
      _
    $region13: #{tpu_custom_call.1} parent=1 // pred_fallthru
      _
    // Predicated region
    $region14: #{tpu_custom_call.1} parent=1 // pred_check
      _
    $region15: #{tpu_custom_call.1} parent=1 // pred_check_branch
      %40 = sbr.rel (0) target = $region17
    $region16: #{tpu_custom_call.1} parent=1 // pred_region
      %s42 = ssub.s32 2048, 2048
      %43 = vsyncadd [#allocation6], %s42
      %s44 = sshll.u32 [#allocation7], 4
      %s45 = int_to_ptr.vmem [resolvable:$true] %s44
      %50 = dma.hbm_to_vmem [thread:$0]  %s3, 2048, %s45, [#allocation6], 64, 64, 4
    $region17: #{tpu_custom_call.1} parent=1 // pred_fallthru
      _
    // Predicated region
    $region18: #{tpu_custom_call.1} parent=1 // pred_check
      _
    $region19: #{tpu_custom_call.1} parent=1 // pred_check_branch
      %52 = sbr.rel (0) target = $region21
    $region20: #{tpu_custom_call.1} parent=1 // pred_region
      _
    $region21: #{tpu_custom_call.1} parent=1 // pred_fallthru
      _
    // Predicated region
    $region22: #{tpu_custom_call.1} parent=1 // pred_check
      _
    $region23: #{tpu_custom_call.1} parent=1 // pred_check_branch
      %54 = sbr.rel (0) target = $region25
    $region24: #{tpu_custom_call.1} parent=1 // pred_region
      %55 = dma.done [#allocation3], 256
    $region25: #{tpu_custom_call.1} parent=1 // pred_fallthru
      _
    // Predicated region
    $region26: #{tpu_custom_call.1} parent=1 // pred_check
      _
    $region27: #{tpu_custom_call.1} parent=1 // pred_check_branch
      %57 = sbr.rel (0) target = $region29
    $region28: #{tpu_custom_call.1} parent=1 // pred_region
      %58 = dma.done [#allocation6], 512
    $region29: #{tpu_custom_call.1} parent=1 // pred_fallthru
      _
    // Predicated region
    $region30: #{tpu_custom_call.1} parent=1 // pred_check
      _
    $region31: #{tpu_custom_call.1} parent=1 // pred_check_branch
      %60 = sbr.rel (0) target = $region33
    $region32: #{tpu_custom_call.1} parent=1 // pred_region
      %61 = dma.done [#allocation6], 2048
    $region33: #{tpu_custom_call.1} parent=1 // pred_fallthru
      _
    %v63 = vld [vmem:[#allocation2] sm:$0xff]
    %v64 = vld [vmem:[#allocation2 + $0x8] sm:$0xff]
    %v65 = vpack.c.bf16 %v64, %v63
    %v66 = vld [vmem:[#allocation5] sm:$0xff]
    %v67 = vld [vmem:[#allocation5 + $0x8] sm:$0xff]
    %v68 = vld [vmem:[#allocation5 + $0x10] sm:$0xff]
    %v69 = vld [vmem:[#allocation5 + $0x18] sm:$0xff]
    %v70 = vld [vmem:[%s2] sm:$0x3]
    %v72 = vlaneseq
    %v73 = vshrl.u32 %v72, 7
    %v74 = vsub.s32 0, %v73
    %v75 = vrot.slane %v70, %v74
    %v76 = vlaneseq
    %v77 = vshrl.u32 %v76, 7
    %v78 = vsub.s32 1, %v77
    %v79 = vrot.slane %v70, %v78
    %v86 = vunpack.c.l.b16 %v66
    %v87 = vunpack.c.h.b16 %v66
    %v88 = vunpack.c.l.b16 %v67
    %v89 = vunpack.c.h.b16 %v67
    %v90 = vunpack.c.l.b16 %v68
    %v91 = vunpack.c.h.b16 %v68
    %v92 = vunpack.c.l.b16 %v69
    %v93 = vunpack.c.h.b16 %v69
    %v94 = vpack.c.b16 %v88, %v86
    %v95 = vpack.c.b16 %v89, %v87
    %v96 = vpack.c.b16 %v92, %v90
    %v97 = vpack.c.b16 %v93, %v91
    %vm102 = vcmask 261120
    %v104 = vsel %vm102, %v65, 0
    %106 = vmatprep.subr.bf16.mxu0 %v95
    %107 = vmatpush1.bf16.msra.mxu0 %v94
    %108 = vmatprep.subr.bf16.mxu0 %v97
    %109 = vmatpush1.bf16.msra.mxu0 %v96
    %110 = vmatprep.subr.bf16.mxu0 0
    %111 = vmatpush1.bf16.msra.mxu0 0
    %112 = vmatprep.subr.bf16.mxu0 0
    %113 = vmatpush1.bf16.msra.mxu0 0
    %114 = vmatprep.subr.bf16.mxu0 0
    %115 = vmatpush1.bf16.msra.mxu0 0
    %116 = vmatprep.subr.bf16.mxu0 0
    %117 = vmatpush1.bf16.msra.mxu0 0
    %118 = vmatprep.subr.bf16.mxu0 0
    %119 = vmatpush1.bf16.msra.mxu0 0
    %120 = vmatprep.subr.bf16.mxu0 0
    %121 = vmatpush1.bf16.msra.mxu0 0
    %122 = vmatprep.subr.bf16.mxu0 0
    %123 = vmatpush1.bf16.msra.mxu0 0
    %124 = vmatprep.subr.bf16.mxu0 0
    %125 = vmatpush1.bf16.msra.mxu0 0
    %126 = vmatprep.subr.bf16.mxu0 0
    %127 = vmatpush1.bf16.msra.mxu0 0
    %128 = vmatprep.subr.bf16.mxu0 0
    %129 = vmatpush1.bf16.msra.mxu0 0
    %130 = vmatprep.subr.bf16.mxu0 0
    %131 = vmatpush1.bf16.msra.mxu0 0
    %132 = vmatprep.subr.bf16.mxu0 0
    %133 = vmatpush1.bf16.msra.mxu0 0
    %134 = vmatprep.subr.bf16.mxu0 0
    %135 = vmatpush1.bf16.msra.mxu0 0
    %136 = vmatprep.subr.bf16.mxu0 0
    %137 = vmatpush1.bf16.msra.mxu0 0
    %138 = vmatprep.mubr.bf16.mxu0 0
    %139 = vmatmul.mubr.bf16.gmra.mrb[0].mxu0 %v104
    %v140 = vpop.f32.mrb[0].mxu0
    %v141 = vadd.f32 %v75, %v140
    %v142 = vpop.f32.mrb[0].mxu0
    %v143 = vadd.f32 %v79, %v142
    %v144 = vpop.f32.mrb[0].mxu0
    %v145 = vadd.f32 %v75, %v144
    %v146 = vpop.f32.mrb[0].mxu0
    %v147 = vadd.f32 %v79, %v146
    %148 = vdwg.mxu0
    %v149 = vmax.f32 %v141, 0.0
    %v150 = vmax.f32 %v143, 0.0
    %v151 = vmax.f32 %v145, 0.0
    %v152 = vmax.f32 %v147, 0.0
    %v153 = vpack.c.bf16 %v151, %v149
    %v154 = vpack.c.bf16 %v152, %v150
    %v155 = vld [vmem:[#allocation7] sm:$0xf]
    %v156 = vld [vmem:[#allocation7 + $0x4] sm:$0xf]
    %v157 = vld [vmem:[#allocation7 + $0x8] sm:$0xf]
    %v158 = vld [vmem:[#allocation7 + $0xc] sm:$0xf]
    %v159 = vld [vmem:[#allocation7 + $0x10] sm:$0xf]
    %v160 = vld [vmem:[#allocation7 + $0x14] sm:$0xf]
    %v161 = vld [vmem:[#allocation7 + $0x18] sm:$0xf]
    %v162 = vld [vmem:[#allocation7 + $0x1c] sm:$0xf]
    %v163 = vld [vmem:[#allocation7 + $0x20] sm:$0xf]
    %v164 = vld [vmem:[#allocation7 + $0x24] sm:$0xf]
    %v165 = vld [vmem:[#allocation7 + $0x28] sm:$0xf]
    %v166 = vld [vmem:[#allocation7 + $0x2c] sm:$0xf]
    %v167 = vld [vmem:[#allocation7 + $0x30] sm:$0xf]
    %v168 = vld [vmem:[#allocation7 + $0x34] sm:$0xf]
    %v169 = vld [vmem:[#allocation7 + $0x38] sm:$0xf]
    %v170 = vld [vmem:[#allocation7 + $0x3c] sm:$0xf]
    %v171 = vld [vmem:[#allocation7 + $0x40] sm:$0xf]
    %v172 = vld [vmem:[#allocation7 + $0x44] sm:$0xf]
    %v173 = vld [vmem:[#allocation7 + $0x48] sm:$0xf]
    %v174 = vld [vmem:[#allocation7 + $0x4c] sm:$0xf]
    %v175 = vld [vmem:[#allocation7 + $0x50] sm:$0xf]
    %v176 = vld [vmem:[#allocation7 + $0x54] sm:$0xf]
    %v177 = vld [vmem:[#allocation7 + $0x58] sm:$0xf]
    %v178 = vld [vmem:[#allocation7 + $0x5c] sm:$0xf]
    %v179 = vld [vmem:[#allocation7 + $0x60] sm:$0xf]
    %v180 = vld [vmem:[#allocation7 + $0x64] sm:$0xf]
    %v181 = vld [vmem:[#allocation7 + $0x68] sm:$0xf]
    %v182 = vld [vmem:[#allocation7 + $0x6c] sm:$0xf]
    %v183 = vld [vmem:[#allocation7 + $0x70] sm:$0xf]
    %v184 = vld [vmem:[#allocation7 + $0x74] sm:$0xf]
    %v185 = vld [vmem:[#allocation7 + $0x78] sm:$0xf]
    %v186 = vld [vmem:[#allocation7 + $0x7c] sm:$0xf]
    %v187 = vld [vmem:[%s4] sm:$0x1]
    %v189 = vlaneseq
    %v190 = vshrl.u32 %v189, 7
    %v191 = vsub.s32 0, %v190
    %v192 = vrot.slane %v187, %v191
    %v226 = vunpack.c.l.b16 %v155
    %v227 = vunpack.c.l.b16 %v156
    %v228 = vunpack.c.l.b16 %v157
    %v229 = vunpack.c.l.b16 %v158
    %v230 = vunpack.c.l.b16 %v159
    %v231 = vunpack.c.l.b16 %v160
    %v232 = vunpack.c.l.b16 %v161
    %v233 = vunpack.c.l.b16 %v162
    %v234 = vunpack.c.l.b16 %v163
    %v235 = vunpack.c.l.b16 %v164
    %v236 = vunpack.c.l.b16 %v165
    %v237 = vunpack.c.l.b16 %v166
    %v238 = vunpack.c.l.b16 %v167
    %v239 = vunpack.c.l.b16 %v168
    %v240 = vunpack.c.l.b16 %v169
    %v241 = vunpack.c.l.b16 %v170
    %v242 = vunpack.c.l.b16 %v171
    %v243 = vunpack.c.l.b16 %v172
    %v244 = vunpack.c.l.b16 %v173
    %v245 = vunpack.c.l.b16 %v174
    %v246 = vunpack.c.l.b16 %v175
    %v247 = vunpack.c.l.b16 %v176
    %v248 = vunpack.c.l.b16 %v177
    %v249 = vunpack.c.l.b16 %v178
    %v250 = vunpack.c.l.b16 %v179
    %v251 = vunpack.c.l.b16 %v180
    %v252 = vunpack.c.l.b16 %v181
    %v253 = vunpack.c.l.b16 %v182
    %v254 = vunpack.c.l.b16 %v183
    %v255 = vunpack.c.l.b16 %v184
    %v256 = vunpack.c.l.b16 %v185
    %v257 = vunpack.c.l.b16 %v186
    %v258 = vpack.c.b16 %v227, %v226
    %v259 = vpack.c.b16 %v229, %v228
    %v260 = vpack.c.b16 %v231, %v230
    %v261 = vpack.c.b16 %v233, %v232
    %v262 = vpack.c.b16 %v235, %v234
    %v263 = vpack.c.b16 %v237, %v236
    %v264 = vpack.c.b16 %v239, %v238
    %v265 = vpack.c.b16 %v241, %v240
    %v266 = vpack.c.b16 %v243, %v242
    %v267 = vpack.c.b16 %v245, %v244
    %v268 = vpack.c.b16 %v247, %v246
    %v269 = vpack.c.b16 %v249, %v248
    %v270 = vpack.c.b16 %v251, %v250
    %v271 = vpack.c.b16 %v253, %v252
    %v272 = vpack.c.b16 %v255, %v254
    %v273 = vpack.c.b16 %v257, %v256
    %290 = vmatprep.subr.bf16.mxu0 0
    %291 = vmatpush1.bf16.msra.mxu0 %v258
    %292 = vmatprep.subr.bf16.mxu0 0
    %293 = vmatpush1.bf16.msra.mxu0 %v259
    %294 = vmatprep.subr.bf16.mxu0 0
    %295 = vmatpush1.bf16.msra.mxu0 %v260
    %296 = vmatprep.subr.bf16.mxu0 0
    %297 = vmatpush1.bf16.msra.mxu0 %v261
    %298 = vmatprep.subr.bf16.mxu0 0
    %299 = vmatpush1.bf16.msra.mxu0 %v262
    %300 = vmatprep.subr.bf16.mxu0 0
    %301 = vmatpush1.bf16.msra.mxu0 %v263
    %302 = vmatprep.subr.bf16.mxu0 0
    %303 = vmatpush1.bf16.msra.mxu0 %v264
    %304 = vmatprep.subr.bf16.mxu0 0
    %305 = vmatpush1.bf16.msra.mxu0 %v265
    %306 = vmatprep.subr.bf16.mxu0 0
    %307 = vmatpush1.bf16.msra.mxu0 %v266
    %308 = vmatprep.subr.bf16.mxu0 0
    %309 = vmatpush1.bf16.msra.mxu0 %v267
    %310 = vmatprep.subr.bf16.mxu0 0
    %311 = vmatpush1.bf16.msra.mxu0 %v268
    %312 = vmatprep.subr.bf16.mxu0 0
    %313 = vmatpush1.bf16.msra.mxu0 %v269
    %314 = vmatprep.subr.bf16.mxu0 0
    %315 = vmatpush1.bf16.msra.mxu0 %v270
    %316 = vmatprep.subr.bf16.mxu0 0
    %317 = vmatpush1.bf16.msra.mxu0 %v271
    %318 = vmatprep.subr.bf16.mxu0 0
    %319 = vmatpush1.bf16.msra.mxu0 %v272
    %320 = vmatprep.subr.bf16.mxu0 0
    %321 = vmatpush1.bf16.msra.mxu0 %v273
    %322 = vmatprep.mubr.bf16.mxu0 %v154
    %323 = vmatmul.mubr.bf16.gmra.mrb[0].mxu0 %v153
    %v324 = vpop.f32.mrb[0].mxu0
    %v325 = vadd.f32 %v192, %v324
    %v326 = vpop.f32.mrb[0].mxu0
    %v327 = vpop.f32.mrb[0].mxu0
    %v328 = vadd.f32 %v192, %v327
    %v329 = vpop.f32.mrb[0].mxu0
    %330 = vdwg.mxu0
    %331 = vst [vmem:[#allocation8] sm:$0xff] %v325
    %332 = vst [vmem:[#allocation8 + $0x8] sm:$0xff] %v328
    // Predicated region
    $region34: #{tpu_custom_call.1} parent=1 // pred_check
      _
    $region35: #{tpu_custom_call.1} parent=1 // pred_check_branch
      %334 = sbr.rel (0) target = $region37
    $region36: #{tpu_custom_call.1} parent=1 // pred_region
      %s336 = ssub.s32 256, 128
      %337 = vsyncadd [#allocation4], %s336
      %s338 = sshll.u32 [#allocation8], 4
      %s339 = int_to_ptr.vmem [resolvable:$true] %s338
      %344 = dma.vmem_to_hbm [thread:$0]  %s339, 128, %s5, [#allocation4], 128, 128, 8
    $region37: #{tpu_custom_call.1} parent=1 // pred_fallthru
      _
    // Predicated region
    $region38: #{tpu_custom_call.1} parent=1 // pred_check
      _
    $region39: #{tpu_custom_call.1} parent=1 // pred_check_branch
      %346 = sbr.rel (0) target = $region41
    $region40: #{tpu_custom_call.1} parent=1 // pred_region
      %347 = dma.done [#allocation4], 256
    $region41: #{tpu_custom_call.1} parent=1 // pred_fallthru
      _
    %348 = vsyncpa [#allocation3], 1
    %349 = vsyncpa [#allocation6], 1
    %350 = vsyncpa [#allocation4], 1

// kernel: tpu_custom_call.1
$region0: #{tpu_custom_call.1}
  #allocation0 [shape = 'u32[]', space=smem, size = 0x4, offset = 0x4, fixed_abs, tag = 'smem constant byte address 0x4 - core index']
  #allocation1 [shape = 'u32[144,128]{1,0:T(1,128)}', space=vmem, size = 0x12000, scoped, tag = 'internal scratch']
  %s0 = inlined_call_operand.hbm [shape: f32[8,32], index: 0, kind: input, shape index: {}]
  %s1 = inlined_call_operand.hbm [shape: bf16[32,256], index: 1, kind: input, shape index: {}]
  %s2 = inlined_call_operand.vmem [shape: f32[1,256], index: 2, kind: input, shape index: {}]
  %s3 = inlined_call_operand.hbm [shape: bf16[256,128], index: 3, kind: input, shape index: {}]
  %s4 = inlined_call_operand.vmem [shape: f32[1,128], index: 4, kind: input, shape index: {}]
  %s5 = inlined_call_operand.hbm [shape: f32[8,128], index: 5, kind: output, shape index: {}]
  %s6 = sld [smem:[#allocation0]]
  $region42: #{tpu_custom_call.1} parent=0
    _
  %s8 = ssub.s32 1, %s6
  %s9 = scalar_select 0, %s8, %s6
  $region1: #{tpu_custom_call.1} parent=0
    #allocation2 [shape = 'u8[8192]{0}', space=vmem, size = 0x2000, scoped, tag = 'input window, operand 0, single buffered']
    #allocation3 [shape = 's32[1]{0}', space=sflag, size = 0x4, scoped, tag = 'scoped memory for tpu_custom_call.1']
    #allocation4 [shape = 's32[1]{0}', space=sflag, size = 0x4, scoped, tag = 'scoped memory for tpu_custom_call.1']
    #allocation5 [shape = 'u8[16384]{0}', space=vmem, size = 0x4000, scoped, tag = 'input window, operand 1, single buffered']
    #allocation6 [shape = 's32[1]{0}', space=sflag, size = 0x4, scoped, tag = 'scoped memory for tpu_custom_call.1']
    #allocation7 [shape = 'u8[65536]{0}', space=vmem, size = 0x10000, scoped, tag = 'input window, operand 3, single buffered']
    #allocation8 [shape = 'u8[8192]{0}', space=vmem, size = 0x2000, scoped, tag = 'output window, operand 0, single buffered']
    %10 = vsyncpa [#allocation3], 0
    %11 = vsyncpa [#allocation6], 0
    %12 = vsyncpa [#allocation4], 0
    // Predicated region
    $region2: #{tpu_custom_call.1} parent=1 // pred_check
      _
    $region3: #{tpu_custom_call.1} parent=1 // pred_check_branch
      %14 = sbr.rel (0) target = $region5
    $region4: #{tpu_custom_call.1} parent=1 // pred_region
      %s16 = ssub.s32 256, 128
      %17 = vsyncadd [#allocation3], %s16
      %s18 = sshll.u32 [#allocation2], 4
      %s19 = int_to_ptr.vmem [resolvable:$true] %s18
      %24 = dma.hbm_to_vmem [thread:$0]  %s0, 128, %s19, [#allocation3], 128, 128, 8
    $region5: #{tpu_custom_call.1} parent=1 // pred_fallthru
      _
    // Predicated region
    $region6: #{tpu_custom_call.1} parent=1 // pred_check
      _
    $region7: #{tpu_custom_call.1} parent=1 // pred_check_branch
      %26 = sbr.rel (0) target = $region9
    $region8: #{tpu_custom_call.1} parent=1 // pred_region
      %s28 = ssub.s32 512, 512
      %29 = vsyncadd [#allocation6], %s28
      %s30 = sshll.u32 [#allocation5], 4
      %s31 = int_to_ptr.vmem [resolvable:$true] %s30
      %36 = dma.hbm_to_vmem [thread:$0]  %s1, 512, %s31, [#allocation6], 128, 128, 8
    $region9: #{tpu_custom_call.1} parent=1 // pred_fallthru
      _
    // Predicated region
    $region10: #{tpu_custom_call.1} parent=1 // pred_check
      _
    $region11: #{tpu_custom_call.1} parent=1 // pred_check_branch
      %38 = sbr.rel (0) target = $region13
    $region12: #{tpu_custom_call.1} parent=1 // pred_region
      _
    $region13: #{tpu_custom_call.1} parent=1 // pred_fallthru
      _
    // Predicated region
    $region14: #{tpu_custom_call.1} parent=1 // pred_check
      _
    $region15: #{tpu_custom_call.1} parent=1 // pred_check_branch
      %40 = sbr.rel (0) target = $region17
    $region16: #{tpu_custom_call.1} parent=1 // pred_region
      %s42 = ssub.s32 2048, 2048
      %43 = vsyncadd [#allocation6], %s42
      %s44 = sshll.u32 [#allocation7], 4
      %s45 = int_to_ptr.vmem [resolvable:$true] %s44
      %50 = dma.hbm_to_vmem [thread:$0]  %s3, 2048, %s45, [#allocation6], 64, 64, 4
    $region17: #{tpu_custom_call.1} parent=1 // pred_fallthru
      _
    // Predicated region
    $region18: #{tpu_custom_call.1} parent=1 // pred_check
      _
    $region19: #{tpu_custom_call.1} parent=1 // pred_check_branch
      %52 = sbr.rel (0) target = $region21
    $region20: #{tpu_custom_call.1} parent=1 // pred_region
      _
    $region21: #{tpu_custom_call.1} parent=1 // pred_fallthru
      _
    // Predicated region
    $region22: #{tpu_custom_call.1} parent=1 // pred_check
      _
    $region23: #{tpu_custom_call.1} parent=1 // pred_check_branch
      %54 = sbr.rel (0) target = $region25
    $region24: #{tpu_custom_call.1} parent=1 // pred_region
      %55 = dma.done [#allocation3], 256
    $region25: #{tpu_custom_call.1} parent=1 // pred_fallthru
      _
    // Predicated region
    $region26: #{tpu_custom_call.1} parent=1 // pred_check
      _
    $region27: #{tpu_custom_call.1} parent=1 // pred_check_branch
      %57 = sbr.rel (0) target = $region29
    $region28: #{tpu_custom_call.1} parent=1 // pred_region
      %58 = dma.done [#allocation6], 512
    $region29: #{tpu_custom_call.1} parent=1 // pred_fallthru
      _
    // Predicated region
    $region30: #{tpu_custom_call.1} parent=1 // pred_check
      _
    $region31: #{tpu_custom_call.1} parent=1 // pred_check_branch
      %60 = sbr.rel (0) target = $region33
    $region32: #{tpu_custom_call.1} parent=1 // pred_region
      %61 = dma.done [#allocation6], 2048
    $region33: #{tpu_custom_call.1} parent=1 // pred_fallthru
      _
    %v63 = vld [vmem:[#allocation2] sm:$0xff]
    %v64 = vld [vmem:[#allocation2 + $0x8] sm:$0xff]
    %v65 = vpack.c.bf16 %v64, %v63
    %v66 = vld [vmem:[#allocation5] sm:$0xff]
    %v67 = vld [vmem:[#allocation5 + $0x8] sm:$0xff]
    %v68 = vld [vmem:[#allocation5 + $0x10] sm:$0xff]
    %v69 = vld [vmem:[#allocation5 + $0x18] sm:$0xff]
    %v70 = vld [vmem:[%s2] sm:$0x3]
    %v72 = vlaneseq
    %v73 = vshrl.u32 %v72, 7
    %v74 = vsub.s32 0, %v73
    %v75 = vrot.slane %v70, %v74
    %v76 = vlaneseq
    %v77 = vshrl.u32 %v76, 7
    %v78 = vsub.s32 1, %v77
    %v79 = vrot.slane %v70, %v78
    %v86 = vunpack.c.l.b16 %v66
    %v87 = vunpack.c.h.b16 %v66
    %v88 = vunpack.c.l.b16 %v67
    %v89 = vunpack.c.h.b16 %v67
    %v90 = vunpack.c.l.b16 %v68
    %v91 = vunpack.c.h.b16 %v68
    %v92 = vunpack.c.l.b16 %v69
    %v93 = vunpack.c.h.b16 %v69
    %v94 = vpack.c.b16 %v88, %v86
    %v95 = vpack.c.b16 %v89, %v87
    %v96 = vpack.c.b16 %v92, %v90
    %v97 = vpack.c.b16 %v93, %v91
    %vm102 = vcmask 261120
    %v104 = vsel %vm102, %v65, 0
    %106 = vmatprep.subr.bf16.mxu0 %v95
    %107 = vmatpush1.bf16.msra.mxu0 %v94
    %108 = vmatprep.subr.bf16.mxu0 %v97
    %109 = vmatpush1.bf16.msra.mxu0 %v96
    %110 = vmatprep.subr.bf16.mxu0 0
    %111 = vmatpush1.bf16.msra.mxu0 0
    %112 = vmatprep.subr.bf16.mxu0 0
    %113 = vmatpush1.bf16.msra.mxu0 0
    %114 = vmatprep.subr.bf16.mxu0 0
    %115 = vmatpush1.bf16.msra.mxu0 0
    %116 = vmatprep.subr.bf16.mxu0 0
    %117 = vmatpush1.bf16.msra.mxu0 0
    %118 = vmatprep.subr.bf16.mxu0 0
    %119 = vmatpush1.bf16.msra.mxu0 0
    %120 = vmatprep.subr.bf16.mxu0 0
    %121 = vmatpush1.bf16.msra.mxu0 0
    %122 = vmatprep.subr.bf16.mxu0 0
    %123 = vmatpush1.bf16.msra.mxu0 0
    %124 = vmatprep.subr.bf16.mxu0 0
    %125 = vmatpush1.bf16.msra.mxu0 0
    %126 = vmatprep.subr.bf16.mxu0 0
    %127 = vmatpush1.bf16.msra.mxu0 0
    %128 = vmatprep.subr.bf16.mxu0 0
    %129 = vmatpush1.bf16.msra.mxu0 0
    %130 = vmatprep.subr.bf16.mxu0 0
    %131 = vmatpush1.bf16.msra.mxu0 0
    %132 = vmatprep.subr.bf16.mxu0 0
    %133 = vmatpush1.bf16.msra.mxu0 0
    %134 = vmatprep.subr.bf16.mxu0 0
    %135 = vmatpush1.bf16.msra.mxu0 0
    %136 = vmatprep.subr.bf16.mxu0 0
    %137 = vmatpush1.bf16.msra.mxu0 0
    %138 = vmatprep.mubr.bf16.mxu0 0
    %139 = vmatmul.mubr.bf16.gmra.mrb[0].mxu0 %v104
    %v140 = vpop.f32.mrb[0].mxu0
    %v141 = vadd.f32 %v75, %v140
    %v142 = vpop.f32.mrb[0].mxu0
    %v143 = vadd.f32 %v79, %v142
    %v144 = vpop.f32.mrb[0].mxu0
    %v145 = vadd.f32 %v75, %v144
    %v146 = vpop.f32.mrb[0].mxu0
    %v147 = vadd.f32 %v79, %v146
    %148 = vdwg.mxu0
    %v149 = vmax.f32 %v141, 0.0
    %v150 = vmax.f32 %v143, 0.0
    %v151 = vmax.f32 %v145, 0.0
    %v152 = vmax.f32 %v147, 0.0
    %v153 = vpack.c.bf16 %v151, %v149
    %v154 = vpack.c.bf16 %v152, %v150
    %v155 = vld [vmem:[#allocation7] sm:$0xf]
    %v156 = vld [vmem:[#allocation7 + $0x4] sm:$0xf]
    %v157 = vld [vmem:[#allocation7 + $0x8] sm:$0xf]
    %v158 = vld [vmem:[#allocation7 + $0xc] sm:$0xf]
    %v159 = vld [vmem:[#allocation7 + $0x10] sm:$0xf]
    %v160 = vld [vmem:[#allocation7 + $0x14] sm:$0xf]
    %v161 = vld [vmem:[#allocation7 + $0x18] sm:$0xf]
    %v162 = vld [vmem:[#allocation7 + $0x1c] sm:$0xf]
    %v163 = vld [vmem:[#allocation7 + $0x20] sm:$0xf]
    %v164 = vld [vmem:[#allocation7 + $0x24] sm:$0xf]
    %v165 = vld [vmem:[#allocation7 + $0x28] sm:$0xf]
    %v166 = vld [vmem:[#allocation7 + $0x2c] sm:$0xf]
    %v167 = vld [vmem:[#allocation7 + $0x30] sm:$0xf]
    %v168 = vld [vmem:[#allocation7 + $0x34] sm:$0xf]
    %v169 = vld [vmem:[#allocation7 + $0x38] sm:$0xf]
    %v170 = vld [vmem:[#allocation7 + $0x3c] sm:$0xf]
    %v171 = vld [vmem:[#allocation7 + $0x40] sm:$0xf]
    %v172 = vld [vmem:[#allocation7 + $0x44] sm:$0xf]
    %v173 = vld [vmem:[#allocation7 + $0x48] sm:$0xf]
    %v174 = vld [vmem:[#allocation7 + $0x4c] sm:$0xf]
    %v175 = vld [vmem:[#allocation7 + $0x50] sm:$0xf]
    %v176 = vld [vmem:[#allocation7 + $0x54] sm:$0xf]
    %v177 = vld [vmem:[#allocation7 + $0x58] sm:$0xf]
    %v178 = vld [vmem:[#allocation7 + $0x5c] sm:$0xf]
    %v179 = vld [vmem:[#allocation7 + $0x60] sm:$0xf]
    %v180 = vld [vmem:[#allocation7 + $0x64] sm:$0xf]
    %v181 = vld [vmem:[#allocation7 + $0x68] sm:$0xf]
    %v182 = vld [vmem:[#allocation7 + $0x6c] sm:$0xf]
    %v183 = vld [vmem:[#allocation7 + $0x70] sm:$0xf]
    %v184 = vld [vmem:[#allocation7 + $0x74] sm:$0xf]
    %v185 = vld [vmem:[#allocation7 + $0x78] sm:$0xf]
    %v186 = vld [vmem:[#allocation7 + $0x7c] sm:$0xf]
    %v187 = vld [vmem:[%s4] sm:$0x1]
    %v189 = vlaneseq
    %v190 = vshrl.u32 %v189, 7
    %v191 = vsub.s32 0, %v190
    %v192 = vrot.slane %v187, %v191
    %v226 = vunpack.c.l.b16 %v155
    %v227 = vunpack.c.l.b16 %v156
    %v228 = vunpack.c.l.b16 %v157
    %v229 = vunpack.c.l.b16 %v158
    %v230 = vunpack.c.l.b16 %v159
    %v231 = vunpack.c.l.b16 %v160
    %v232 = vunpack.c.l.b16 %v161
    %v233 = vunpack.c.l.b16 %v162
    %v234 = vunpack.c.l.b16 %v163
    %v235 = vunpack.c.l.b16 %v164
    %v236 = vunpack.c.l.b16 %v165
    %v237 = vunpack.c.l.b16 %v166
    %v238 = vunpack.c.l.b16 %v167
    %v239 = vunpack.c.l.b16 %v168
    %v240 = vunpack.c.l.b16 %v169
    %v241 = vunpack.c.l.b16 %v170
    %v242 = vunpack.c.l.b16 %v171
    %v243 = vunpack.c.l.b16 %v172
    %v244 = vunpack.c.l.b16 %v173
    %v245 = vunpack.c.l.b16 %v174
    %v246 = vunpack.c.l.b16 %v175
    %v247 = vunpack.c.l.b16 %v176
    %v248 = vunpack.c.l.b16 %v177
    %v249 = vunpack.c.l.b16 %v178
    %v250 = vunpack.c.l.b16 %v179
    %v251 = vunpack.c.l.b16 %v180
    %v252 = vunpack.c.l.b16 %v181
    %v253 = vunpack.c.l.b16 %v182
    %v254 = vunpack.c.l.b16 %v183
    %v255 = vunpack.c.l.b16 %v184
    %v256 = vunpack.c.l.b16 %v185
    %v257 = vunpack.c.l.b16 %v186
    %v258 = vpack.c.b16 %v227, %v226
    %v259 = vpack.c.b16 %v229, %v228
    %v260 = vpack.c.b16 %v231, %v230
    %v261 = vpack.c.b16 %v233, %v232
    %v262 = vpack.c.b16 %v235, %v234
    %v263 = vpack.c.b16 %v237, %v236
    %v264 = vpack.c.b16 %v239, %v238
    %v265 = vpack.c.b16 %v241, %v240
    %v266 = vpack.c.b16 %v243, %v242
    %v267 = vpack.c.b16 %v245, %v244
    %v268 = vpack.c.b16 %v247, %v246
    %v269 = vpack.c.b16 %v249, %v248
    %v270 = vpack.c.b16 %v251, %v250
    %v271 = vpack.c.b16 %v253, %v252
    %v272 = vpack.c.b16 %v255, %v254
    %v273 = vpack.c.b16 %v257, %v256
    %290 = vmatprep.subr.bf16.mxu0 0
    %291 = vmatpush1.bf16.msra.mxu0 %v258
    %292 = vmatprep.subr.bf16.mxu0 0
    %293 = vmatpush1.bf16.msra.mxu0 %v259
    %294 = vmatprep.subr.bf16.mxu0 0
    %295 = vmatpush1.bf16.msra.mxu0 %v260
    %296 = vmatprep.subr.bf16.mxu0 0
    %297 = vmatpush1.bf16.msra.mxu0 %v261
    %298 = vmatprep.subr.bf16.mxu0 0
    %299 = vmatpush1.bf16.msra.mxu0 %v262
    %300 = vmatprep.subr.bf16.mxu0 0
    %301 = vmatpush1.bf16.msra.mxu0 %v263
    %302 = vmatprep.subr.bf16.mxu0 0
    %303 = vmatpush1.bf16.msra.mxu0 %v264
    %304 = vmatprep.subr.bf16.mxu0 0
    %305 = vmatpush1.bf16.msra.mxu0 %v265
    %306 = vmatprep.subr.bf16.mxu0 0
    %307 = vmatpush1.bf16.msra.mxu0 %v266
    %308 = vmatprep.subr.bf16.mxu0 0
    %309 = vmatpush1.bf16.msra.mxu0 %v267
    %310 = vmatprep.subr.bf16.mxu0 0
    %311 = vmatpush1.bf16.msra.mxu0 %v268
    %312 = vmatprep.subr.bf16.mxu0 0
    %313 = vmatpush1.bf16.msra.mxu0 %v269
    %314 = vmatprep.subr.bf16.mxu0 0
    %315 = vmatpush1.bf16.msra.mxu0 %v270
    %316 = vmatprep.subr.bf16.mxu0 0
    %317 = vmatpush1.bf16.msra.mxu0 %v271
    %318 = vmatprep.subr.bf16.mxu0 0
    %319 = vmatpush1.bf16.msra.mxu0 %v272
    %320 = vmatprep.subr.bf16.mxu0 0
    %321 = vmatpush1.bf16.msra.mxu0 %v273
    %322 = vmatprep.mubr.bf16.mxu0 %v154
    %323 = vmatmul.mubr.bf16.gmra.mrb[0].mxu0 %v153
    %v324 = vpop.f32.mrb[0].mxu0
    %v325 = vadd.f32 %v192, %v324
    %v326 = vpop.f32.mrb[0].mxu0
    %v327 = vpop.f32.mrb[0].mxu0
    %v328 = vadd.f32 %v192, %v327
    %v329 = vpop.f32.mrb[0].mxu0
    %330 = vdwg.mxu0
    %331 = vst [vmem:[#allocation8] sm:$0xff] %v325
    %332 = vst [vmem:[#allocation8 + $0x8] sm:$0xff] %v328
    // Predicated region
    $region34: #{tpu_custom_call.1} parent=1 // pred_check
      _
    $region35: #{tpu_custom_call.1} parent=1 // pred_check_branch
      %334 = sbr.rel (0) target = $region37
    $region36: #{tpu_custom_call.1} parent=1 // pred_region
      %s336 = ssub.s32 256, 128
      %337 = vsyncadd [#allocation4], %s336
      %s338 = sshll.u32 [#allocation8], 4
      %s339 = int_to_ptr.vmem [resolvable:$true] %s338
      %344 = dma.vmem_to_hbm [thread:$0]  %s339, 128, %s5, [#allocation4], 128, 128, 8
    $region37: #{tpu_custom_call.1} parent=1 // pred_fallthru
      _
    // Predicated region
    $region38: #{tpu_custom_call.1} parent=1 // pred_check
      _
    $region39: #{tpu_custom_call.1} parent=1 // pred_check_branch
      %346 = sbr.rel (0) target = $region41
    $region40: #{tpu_custom_call.1} parent=1 // pred_region
      %347 = dma.done [#allocation4], 256
    $region41: #{tpu_custom_call.1} parent=1 // pred_fallthru
      _
    %348 = vsyncpa [#allocation3], 1
    %349 = vsyncpa [#allocation6], 1
    %350 = vsyncpa [#allocation4], 1

</llo_original>
